<compile_context>
chip_gen: v5e
topology: v5e:2x2
jax: 0.10.0
libtpu: 0.0.40
codegen_flags: <defaults>
</compile_context>

<pallas_src>
import jax
import jax.numpy as jnp
from jax.experimental import pallas as pl
from jax.experimental.pallas import tpu as pltpu

NUM_INPUTS = 784   # 1 * 28 * 28
NUM_OUTPUTS = 10


def _round_up(n, m):
    return ((n + m - 1) // m) * m


def linear_kernel(x_ref, w_ref, b_ref, o_ref):
    # x_ref: (TM, 784) f32, w_ref: (784, 10) bf16, b_ref: (1, 10) f32,
    # o_ref: (TM, 10) f32.
    # In-kernel bf16 cast of x: VPU work hidden under the x-tile DMA.
    x_bf16 = x_ref[...].astype(jnp.bfloat16)
    acc = jnp.dot(x_bf16, w_ref[...], preferred_element_type=jnp.float32)
    o_ref[...] = acc + b_ref[...]


def _select_tm(B, tm):
    if B <= 512:
        # Single small step; only align to the f32 sublane granularity (8).
        return _round_up(max(B, 8), 8)
    # Keep >= 2 grid steps so the parallel batch axis can shard across the
    # two v7x TensorCores; cap at tm to stay inside scoped VMEM.
    return min(tm, _round_up(-(-B // 2), 256))


def linear_net_forward(x, w_t_bf16, bias, *, tm=2048):
    """x: (B, C, H, W) float32; w_t_bf16: (NUM_INPUTS, NUM_OUTPUTS) bf16
    (pre-transposed, see prepare_weight); bias: (NUM_OUTPUTS,) float32."""
    B = x.shape[0]
    x_flat = x.reshape(B, -1)                       # f32, no wrapper cast/pad
    assert x_flat.shape[1] == NUM_INPUTS

    TM = _select_tm(B, tm)
    grid = (pl.cdiv(B, TM),)                        # ragged last block is OK

    b2d = bias.reshape(1, NUM_OUTPUTS).astype(jnp.float32)

    cost = pl.CostEstimate(
        flops=2 * B * NUM_INPUTS * NUM_OUTPUTS,
        transcendentals=0,
        bytes_accessed=(x_flat.size * 4                       # f32 x read
                        + w_t_bf16.size * 2                   # bf16 weight
                        + b2d.size * 4
                        + B * NUM_OUTPUTS * 4),               # f32 output
    )

    out = pl.pallas_call(
        linear_kernel,
        out_shape=jax.ShapeDtypeStruct((B, NUM_OUTPUTS), jnp.float32),
        grid_spec=pltpu.PrefetchScalarGridSpec(
            num_scalar_prefetch=0,
            grid=grid,
            in_specs=[
                # x tile marches down the batch; weight/bias stay resident.
                pl.BlockSpec((TM, NUM_INPUTS), lambda i: (i, 0)),
                pl.BlockSpec((NUM_INPUTS, NUM_OUTPUTS), lambda i: (0, 0)),
                pl.BlockSpec((1, NUM_OUTPUTS), lambda i: (0, 0)),
            ],
            out_specs=pl.BlockSpec((TM, NUM_OUTPUTS), lambda i: (i, 0)),
        ),
        compiler_params=pltpu.CompilerParams(
            dimension_semantics=("parallel",),      # shardable across TCs
            vmem_limit_bytes=32 << 20,              # v5e default is 16 MB
        ),
        cost_estimate=cost,
    )(x_flat, w_t_bf16, b2d)

    return out


def init_params(key):
    # Deterministic init mimicking nn.Linear's default (uniform +-1/sqrt(fan_in)).
    kw, kb = jax.random.split(key)
    bound = 1.0 / jnp.sqrt(jnp.float32(NUM_INPUTS))
    weight = jax.random.uniform(
        kw, (NUM_OUTPUTS, NUM_INPUTS), jnp.float32, -bound, bound)
    bias = jax.random.uniform(
        kb, (NUM_OUTPUTS,), jnp.float32, -bound, bound)
    return weight, bias


def prepare_weight(weight):
    # Done once outside the per-call path: transpose to matmul-ready layout
    # and cast to the MXU's native bf16 input dtype.
    return weight.T.astype(jnp.bfloat16)            # (784, 10) bf16


if __name__ == "__main__":
    key = jax.random.PRNGKey(0)
    k_x, k_params = jax.random.split(key)

    batch = 8
    # MNIST-style input implied by num_inputs=784: (B, 1, 28, 28) NCHW.
    x = jax.random.normal(k_x, (batch, 1, 28, 28), jnp.float32)
    weight, bias = init_params(k_params)
    w_t_bf16 = prepare_weight(weight)

    y = linear_net_forward(x, w_t_bf16, bias)
    jax.block_until_ready(y)

    # Reference check against plain JAX (f32); tolerance covers the bf16
    # cast of x / weight on the MXU path (accumulation is f32).
    y_ref = x.reshape(batch, -1) @ weight.T + bias
    assert y.shape == (batch, NUM_OUTPUTS)
    assert jnp.allclose(y, y_ref, atol=2e-2, rtol=2e-2)

    print("KERNEL_OK")
</pallas_src>

<mosaic_0001>
module attributes {stable_mosaic.version = 11 : i64} {
  func.func @linear_kernel(%arg0: i32, %arg1: memref<8x784xf32, #tpu.memory_space<vmem>>, %arg2: memref<784x10xbf16, #tpu.memory_space<vmem>>, %arg3: memref<1x10xf32, #tpu.memory_space<vmem>>, %arg4: memref<8x10xf32, #tpu.memory_space<vmem>>) attributes {dimension_semantics = [#tpu.dimension_semantics<parallel>], iteration_bounds = array<i64: 1>, scalar_prefetch = 0 : i64, scratch_operands = 0 : i64, tpu.core_type = #tpu.core_type<tc>, window_params = [{transform_indices = @transform_0, window_bounds = array<i64: 8, 784>}, {pipeline_mode = #tpu.pipeline_mode<synchronous>, transform_indices = @transform_1, window_bounds = array<i64: 784, 10>}, {pipeline_mode = #tpu.pipeline_mode<synchronous>, transform_indices = @transform_2, window_bounds = array<i64: 1, 10>}, {transform_indices = @transform_3, window_bounds = array<i64: 8, 10>}]} {
    %c0 = arith.constant 0 : index
    %c0_0 = arith.constant 0 : index
    %0 = vector.load %arg1[%c0, %c0_0] : memref<8x784xf32, #tpu.memory_space<vmem>>, vector<8x784xf32>
    %1 = arith.truncf %0 : vector<8x784xf32> to vector<8x784xbf16>
    %c0_1 = arith.constant 0 : index
    %c0_2 = arith.constant 0 : index
    %2 = vector.load %arg2[%c0_1, %c0_2] : memref<784x10xbf16, #tpu.memory_space<vmem>>, vector<784x10xbf16>
    %cst = arith.constant dense<0.000000e+00> : vector<8x10xf32>
    %3 = tpu.matmul %1, %2, %cst {dimension_numbers = #tpu.dot_dimension_numbers<[1], [0], [0], [1], [0, 0, 1, 1], [], []>} : vector<8x784xbf16>, vector<784x10xbf16>, vector<8x10xf32> -> vector<8x10xf32>
    %c0_3 = arith.constant 0 : index
    %c0_4 = arith.constant 0 : index
    %4 = vector.load %arg3[%c0_3, %c0_4] : memref<1x10xf32, #tpu.memory_space<vmem>>, vector<1x10xf32>
    %5 = vector.broadcast %4 : vector<1x10xf32> to vector<8x10xf32>
    %6 = arith.addf %3, %5 : vector<8x10xf32>
    %c0_5 = arith.constant 0 : index
    %c0_6 = arith.constant 0 : index
    %7 = vector.load %arg4[%c0_5, %c0_6] : memref<8x10xf32, #tpu.memory_space<vmem>>, vector<8x10xf32>
    tpu.vector_store %arg4[%c0_5, %c0_6], %6 {strides = array<i32>} : memref<8x10xf32, #tpu.memory_space<vmem>>, vector<8x10xf32>,
    return
  }
  func.func @transform_0(%arg0: i32) -> (i32, i32) {
    %c0_i32 = arith.constant 0 : i32
    %c0_i32_0 = arith.constant 0 : i32
    return %arg0, %c0_i32 : i32, i32
  }
  func.func @transform_1(%arg0: i32) -> (i32, i32) {
    %c0_i32 = arith.constant 0 : i32
    %c0_i32_0 = arith.constant 0 : i32
    %c0_i32_1 = arith.constant 0 : i32
    return %c0_i32, %c0_i32_0 : i32, i32
  }
  func.func @transform_2(%arg0: i32) -> (i32, i32) {
    %c0_i32 = arith.constant 0 : i32
    %c0_i32_0 = arith.constant 0 : i32
    %c0_i32_1 = arith.constant 0 : i32
    return %c0_i32, %c0_i32_0 : i32, i32
  }
  func.func @transform_3(%arg0: i32) -> (i32, i32) {
    %c0_i32 = arith.constant 0 : i32
    %c0_i32_0 = arith.constant 0 : i32
    return %arg0, %c0_i32 : i32, i32
  }
}

</mosaic_0001>

<llo_original>
// kernel: tpu_custom_call.1
$region0: #{tpu_custom_call.1}
  #allocation0 [shape = 'u32[]', space=smem, size = 0x4, offset = 0x4, fixed_abs, tag = 'smem constant byte address 0x4 - core index']
  #allocation1 [shape = 'u32[72,128]{1,0:T(1,128)}', space=vmem, size = 0x9000, scoped, tag = 'internal scratch']
  %s0 = inlined_call_operand.vmem [shape: f32[8,784], index: 0, kind: input, shape index: {}]
  %s1 = inlined_call_operand.vmem [shape: bf16[784,10], index: 1, kind: input, shape index: {}]
  %s2 = inlined_call_operand.vmem [shape: f32[1,10], index: 2, kind: input, shape index: {}]
  %s3 = inlined_call_operand.hbm [shape: f32[8,10], index: 3, kind: output, shape index: {}]
  %s4 = sld [smem:[#allocation0]]
  $region22: #{tpu_custom_call.1} parent=0
    _
  %s6 = ssub.s32 1, %s4
  %s7 = scalar_select 0, %s6, %s4
  $region1: #{tpu_custom_call.1} parent=0
    #allocation2 [shape = 'u8[4096]{0}', space=vmem, size = 0x1000, scoped, tag = 'output window, operand 0, single buffered']
    #allocation3 [shape = 's32[1]{0}', space=sflag, size = 0x4, scoped, tag = 'scoped memory for tpu_custom_call.1']
    %8 = vsyncpa [#allocation3], 0
    // Predicated region
    $region2: #{tpu_custom_call.1} parent=1 // pred_check
      _
    $region3: #{tpu_custom_call.1} parent=1 // pred_check_branch
      %10 = sbr.rel (0) target = $region5
    $region4: #{tpu_custom_call.1} parent=1 // pred_region
      _
    $region5: #{tpu_custom_call.1} parent=1 // pred_fallthru
      _
    // Predicated region
    $region6: #{tpu_custom_call.1} parent=1 // pred_check
      _
    $region7: #{tpu_custom_call.1} parent=1 // pred_check_branch
      %12 = sbr.rel (0) target = $region9
    $region8: #{tpu_custom_call.1} parent=1 // pred_region
      _
    $region9: #{tpu_custom_call.1} parent=1 // pred_fallthru
      _
    // Predicated region
    $region10: #{tpu_custom_call.1} parent=1 // pred_check
      _
    $region11: #{tpu_custom_call.1} parent=1 // pred_check_branch
      %14 = sbr.rel (0) target = $region13
    $region12: #{tpu_custom_call.1} parent=1 // pred_region
      _
    $region13: #{tpu_custom_call.1} parent=1 // pred_fallthru
      _
    %v16 = vld [vmem:[%s0] sm:$0xff]
    %v17 = vld [vmem:[%s0 + $0x8] sm:$0xff]
    %v18 = vld [vmem:[%s0 + $0x10] sm:$0xff]
    %v19 = vld [vmem:[%s0 + $0x18] sm:$0xff]
    %v20 = vld [vmem:[%s0 + $0x20] sm:$0xff]
    %v21 = vld [vmem:[%s0 + $0x28] sm:$0xff]
    %v22 = vld [vmem:[%s0 + $0x30] sm:$0xff]
    %v23 = vpack.c.bf16 %v16, %v16
    %v24 = vpack.c.bf16 %v17, %v17
    %v25 = vpack.c.bf16 %v18, %v18
    %v26 = vpack.c.bf16 %v19, %v19
    %v27 = vpack.c.bf16 %v20, %v20
    %v28 = vpack.c.bf16 %v21, %v21
    %v29 = vpack.c.bf16 %v22, %v22
    %v30 = vld [vmem:[%s1] sm:$0xf]
    %v31 = vld [vmem:[%s1 + $0x4] sm:$0xf]
    %v32 = vld [vmem:[%s1 + $0x8] sm:$0xf]
    %v33 = vld [vmem:[%s1 + $0xc] sm:$0xf]
    %v34 = vld [vmem:[%s1 + $0x10] sm:$0xf]
    %v35 = vld [vmem:[%s1 + $0x14] sm:$0xf]
    %v36 = vld [vmem:[%s1 + $0x18] sm:$0xf]
    %v37 = vld [vmem:[%s1 + $0x1c] sm:$0xf]
    %v38 = vld [vmem:[%s1 + $0x20] sm:$0xf]
    %v39 = vld [vmem:[%s1 + $0x24] sm:$0xf]
    %v40 = vld [vmem:[%s1 + $0x28] sm:$0xf]
    %v41 = vld [vmem:[%s1 + $0x2c] sm:$0xf]
    %v42 = vld [vmem:[%s1 + $0x30] sm:$0xf]
    %v43 = vld [vmem:[%s1 + $0x34] sm:$0xf]
    %v44 = vld [vmem:[%s1 + $0x38] sm:$0xf]
    %v45 = vld [vmem:[%s1 + $0x3c] sm:$0xf]
    %v46 = vld [vmem:[%s1 + $0x40] sm:$0xf]
    %v47 = vld [vmem:[%s1 + $0x44] sm:$0xf]
    %v48 = vld [vmem:[%s1 + $0x48] sm:$0xf]
    %v49 = vld [vmem:[%s1 + $0x4c] sm:$0xf]
    %v50 = vld [vmem:[%s1 + $0x50] sm:$0xf]
    %v51 = vld [vmem:[%s1 + $0x54] sm:$0xf]
    %v52 = vld [vmem:[%s1 + $0x58] sm:$0xf]
    %v53 = vld [vmem:[%s1 + $0x5c] sm:$0xf]
    %v54 = vld [vmem:[%s1 + $0x60] sm:$0xf]
    %v55 = vld [vmem:[%s1 + $0x64] sm:$0xf]
    %v56 = vld [vmem:[%s1 + $0x68] sm:$0xf]
    %v57 = vld [vmem:[%s1 + $0x6c] sm:$0xf]
    %v58 = vld [vmem:[%s1 + $0x70] sm:$0xf]
    %v59 = vld [vmem:[%s1 + $0x74] sm:$0xf]
    %v60 = vld [vmem:[%s1 + $0x78] sm:$0xf]
    %v61 = vld [vmem:[%s1 + $0x7c] sm:$0xf]
    %v62 = vld [vmem:[%s1 + $0x80] sm:$0xf]
    %v63 = vld [vmem:[%s1 + $0x84] sm:$0xf]
    %v64 = vld [vmem:[%s1 + $0x88] sm:$0xf]
    %v65 = vld [vmem:[%s1 + $0x8c] sm:$0xf]
    %v66 = vld [vmem:[%s1 + $0x90] sm:$0xf]
    %v67 = vld [vmem:[%s1 + $0x94] sm:$0xf]
    %v68 = vld [vmem:[%s1 + $0x98] sm:$0xf]
    %v69 = vld [vmem:[%s1 + $0x9c] sm:$0xf]
    %v70 = vld [vmem:[%s1 + $0xa0] sm:$0xf]
    %v71 = vld [vmem:[%s1 + $0xa4] sm:$0xf]
    %v72 = vld [vmem:[%s1 + $0xa8] sm:$0xf]
    %v73 = vld [vmem:[%s1 + $0xac] sm:$0xf]
    %v74 = vld [vmem:[%s1 + $0xb0] sm:$0xf]
    %v75 = vld [vmem:[%s1 + $0xb4] sm:$0xf]
    %v76 = vld [vmem:[%s1 + $0xb8] sm:$0xf]
    %v77 = vld [vmem:[%s1 + $0xbc] sm:$0xf]
    %v78 = vld [vmem:[%s1 + $0xc0] sm:$0xf]
    %v79 = vld [vmem:[%s1 + $0xc4] sm:$0xf]
    %v80 = vld [vmem:[%s1 + $0xc8] sm:$0xf]
    %v81 = vld [vmem:[%s1 + $0xcc] sm:$0xf]
    %v82 = vld [vmem:[%s1 + $0xd0] sm:$0xf]
    %v83 = vld [vmem:[%s1 + $0xd4] sm:$0xf]
    %v84 = vld [vmem:[%s1 + $0xd8] sm:$0xf]
    %v85 = vld [vmem:[%s1 + $0xdc] sm:$0xf]
    %v86 = vld [vmem:[%s1 + $0xe0] sm:$0xf]
    %v87 = vld [vmem:[%s1 + $0xe4] sm:$0xf]
    %v88 = vld [vmem:[%s1 + $0xe8] sm:$0xf]
    %v89 = vld [vmem:[%s1 + $0xec] sm:$0xf]
    %v90 = vld [vmem:[%s1 + $0xf0] sm:$0xf]
    %v91 = vld [vmem:[%s1 + $0xf4] sm:$0xf]
    %v92 = vld [vmem:[%s1 + $0xf8] sm:$0xf]
    %v93 = vld [vmem:[%s1 + $0xfc] sm:$0xf]
    %v94 = vld [vmem:[%s1 + $0x100] sm:$0xf]
    %v95 = vld [vmem:[%s1 + $0x104] sm:$0xf]
    %v96 = vld [vmem:[%s1 + $0x108] sm:$0xf]
    %v97 = vld [vmem:[%s1 + $0x10c] sm:$0xf]
    %v98 = vld [vmem:[%s1 + $0x110] sm:$0xf]
    %v99 = vld [vmem:[%s1 + $0x114] sm:$0xf]
    %v100 = vld [vmem:[%s1 + $0x118] sm:$0xf]
    %v101 = vld [vmem:[%s1 + $0x11c] sm:$0xf]
    %v102 = vld [vmem:[%s1 + $0x120] sm:$0xf]
    %v103 = vld [vmem:[%s1 + $0x124] sm:$0xf]
    %v104 = vld [vmem:[%s1 + $0x128] sm:$0xf]
    %v105 = vld [vmem:[%s1 + $0x12c] sm:$0xf]
    %v106 = vld [vmem:[%s1 + $0x130] sm:$0xf]
    %v107 = vld [vmem:[%s1 + $0x134] sm:$0xf]
    %v108 = vld [vmem:[%s1 + $0x138] sm:$0xf]
    %v109 = vld [vmem:[%s1 + $0x13c] sm:$0xf]
    %v110 = vld [vmem:[%s1 + $0x140] sm:$0xf]
    %v111 = vld [vmem:[%s1 + $0x144] sm:$0xf]
    %v112 = vld [vmem:[%s1 + $0x148] sm:$0xf]
    %v113 = vld [vmem:[%s1 + $0x14c] sm:$0xf]
    %v114 = vld [vmem:[%s1 + $0x150] sm:$0xf]
    %v115 = vld [vmem:[%s1 + $0x154] sm:$0xf]
    %v116 = vld [vmem:[%s1 + $0x158] sm:$0xf]
    %v117 = vld [vmem:[%s1 + $0x15c] sm:$0xf]
    %v118 = vld [vmem:[%s1 + $0x160] sm:$0xf]
    %v119 = vld [vmem:[%s1 + $0x164] sm:$0xf]
    %v120 = vld [vmem:[%s1 + $0x168] sm:$0xf]
    %v121 = vld [vmem:[%s1 + $0x16c] sm:$0xf]
    %v122 = vld [vmem:[%s1 + $0x170] sm:$0xf]
    %v123 = vld [vmem:[%s1 + $0x174] sm:$0xf]
    %v124 = vld [vmem:[%s1 + $0x178] sm:$0xf]
    %v125 = vld [vmem:[%s1 + $0x17c] sm:$0xf]
    %v126 = vld [vmem:[%s1 + $0x180] sm:$0xf]
    %v127 = vld [vmem:[%s1 + $0x184] sm:$0xf]
    %v128 = vld [vmem:[%s2] sm:$0x1]
    %v130 = vperm.slane %v128, 0
    %v230 = vunpack.c.l.b16 %v30
    %v231 = vunpack.c.l.b16 %v31
    %v232 = vunpack.c.l.b16 %v32
    %v233 = vunpack.c.l.b16 %v33
    %v234 = vunpack.c.l.b16 %v34
    %v235 = vunpack.c.l.b16 %v35
    %v236 = vunpack.c.l.b16 %v36
    %v237 = vunpack.c.l.b16 %v37
    %v238 = vunpack.c.l.b16 %v38
    %v239 = vunpack.c.l.b16 %v39
    %v240 = vunpack.c.l.b16 %v40
    %v241 = vunpack.c.l.b16 %v41
    %v242 = vunpack.c.l.b16 %v42
    %v243 = vunpack.c.l.b16 %v43
    %v244 = vunpack.c.l.b16 %v44
    %v245 = vunpack.c.l.b16 %v45
    %v246 = vunpack.c.l.b16 %v46
    %v247 = vunpack.c.l.b16 %v47
    %v248 = vunpack.c.l.b16 %v48
    %v249 = vunpack.c.l.b16 %v49
    %v250 = vunpack.c.l.b16 %v50
    %v251 = vunpack.c.l.b16 %v51
    %v252 = vunpack.c.l.b16 %v52
    %v253 = vunpack.c.l.b16 %v53
    %v254 = vunpack.c.l.b16 %v54
    %v255 = vunpack.c.l.b16 %v55
    %v256 = vunpack.c.l.b16 %v56
    %v257 = vunpack.c.l.b16 %v57
    %v258 = vunpack.c.l.b16 %v58
    %v259 = vunpack.c.l.b16 %v59
    %v260 = vunpack.c.l.b16 %v60
    %v261 = vunpack.c.l.b16 %v61
    %v262 = vunpack.c.l.b16 %v62
    %v263 = vunpack.c.l.b16 %v63
    %v264 = vunpack.c.l.b16 %v64
    %v265 = vunpack.c.l.b16 %v65
    %v266 = vunpack.c.l.b16 %v66
    %v267 = vunpack.c.l.b16 %v67
    %v268 = vunpack.c.l.b16 %v68
    %v269 = vunpack.c.l.b16 %v69
    %v270 = vunpack.c.l.b16 %v70
    %v271 = vunpack.c.l.b16 %v71
    %v272 = vunpack.c.l.b16 %v72
    %v273 = vunpack.c.l.b16 %v73
    %v274 = vunpack.c.l.b16 %v74
    %v275 = vunpack.c.l.b16 %v75
    %v276 = vunpack.c.l.b16 %v76
    %v277 = vunpack.c.l.b16 %v77
    %v278 = vunpack.c.l.b16 %v78
    %v279 = vunpack.c.l.b16 %v79
    %v280 = vunpack.c.l.b16 %v80
    %v281 = vunpack.c.l.b16 %v81
    %v282 = vunpack.c.l.b16 %v82
    %v283 = vunpack.c.l.b16 %v83
    %v284 = vunpack.c.l.b16 %v84
    %v285 = vunpack.c.l.b16 %v85
    %v286 = vunpack.c.l.b16 %v86
    %v287 = vunpack.c.l.b16 %v87
    %v288 = vunpack.c.l.b16 %v88
    %v289 = vunpack.c.l.b16 %v89
    %v290 = vunpack.c.l.b16 %v90
    %v291 = vunpack.c.l.b16 %v91
    %v292 = vunpack.c.l.b16 %v92
    %v293 = vunpack.c.l.b16 %v93
    %v294 = vunpack.c.l.b16 %v94
    %v295 = vunpack.c.l.b16 %v95
    %v296 = vunpack.c.l.b16 %v96
    %v297 = vunpack.c.l.b16 %v97
    %v298 = vunpack.c.l.b16 %v98
    %v299 = vunpack.c.l.b16 %v99
    %v300 = vunpack.c.l.b16 %v100
    %v301 = vunpack.c.l.b16 %v101
    %v302 = vunpack.c.l.b16 %v102
    %v303 = vunpack.c.l.b16 %v103
    %v304 = vunpack.c.l.b16 %v104
    %v305 = vunpack.c.l.b16 %v105
    %v306 = vunpack.c.l.b16 %v106
    %v307 = vunpack.c.l.b16 %v107
    %v308 = vunpack.c.l.b16 %v108
    %v309 = vunpack.c.l.b16 %v109
    %v310 = vunpack.c.l.b16 %v110
    %v311 = vunpack.c.l.b16 %v111
    %v312 = vunpack.c.l.b16 %v112
    %v313 = vunpack.c.l.b16 %v113
    %v314 = vunpack.c.l.b16 %v114
    %v315 = vunpack.c.l.b16 %v115
    %v316 = vunpack.c.l.b16 %v116
    %v317 = vunpack.c.l.b16 %v117
    %v318 = vunpack.c.l.b16 %v118
    %v319 = vunpack.c.l.b16 %v119
    %v320 = vunpack.c.l.b16 %v120
    %v321 = vunpack.c.l.b16 %v121
    %v322 = vunpack.c.l.b16 %v122
    %v323 = vunpack.c.l.b16 %v123
    %v324 = vunpack.c.l.b16 %v124
    %v325 = vunpack.c.l.b16 %v125
    %v326 = vunpack.c.l.b16 %v126
    %v327 = vunpack.c.l.b16 %v127
    %v328 = vpack.c.b16 %v231, %v230
    %v329 = vpack.c.b16 %v233, %v232
    %v330 = vpack.c.b16 %v235, %v234
    %v331 = vpack.c.b16 %v237, %v236
    %v332 = vpack.c.b16 %v239, %v238
    %v333 = vpack.c.b16 %v241, %v240
    %v334 = vpack.c.b16 %v243, %v242
    %v335 = vpack.c.b16 %v245, %v244
    %v336 = vpack.c.b16 %v247, %v246
    %v337 = vpack.c.b16 %v249, %v248
    %v338 = vpack.c.b16 %v251, %v250
    %v339 = vpack.c.b16 %v253, %v252
    %v340 = vpack.c.b16 %v255, %v254
    %v341 = vpack.c.b16 %v257, %v256
    %v342 = vpack.c.b16 %v259, %v258
    %v343 = vpack.c.b16 %v261, %v260
    %v344 = vpack.c.b16 %v263, %v262
    %v345 = vpack.c.b16 %v265, %v264
    %v346 = vpack.c.b16 %v267, %v266
    %v347 = vpack.c.b16 %v269, %v268
    %v348 = vpack.c.b16 %v271, %v270
    %v349 = vpack.c.b16 %v273, %v272
    %v350 = vpack.c.b16 %v275, %v274
    %v351 = vpack.c.b16 %v277, %v276
    %v352 = vpack.c.b16 %v279, %v278
    %v353 = vpack.c.b16 %v281, %v280
    %v354 = vpack.c.b16 %v283, %v282
    %v355 = vpack.c.b16 %v285, %v284
    %v356 = vpack.c.b16 %v287, %v286
    %v357 = vpack.c.b16 %v289, %v288
    %v358 = vpack.c.b16 %v291, %v290
    %v359 = vpack.c.b16 %v293, %v292
    %v360 = vpack.c.b16 %v295, %v294
    %v361 = vpack.c.b16 %v297, %v296
    %v362 = vpack.c.b16 %v299, %v298
    %v363 = vpack.c.b16 %v301, %v300
    %v364 = vpack.c.b16 %v303, %v302
    %v365 = vpack.c.b16 %v305, %v304
    %v366 = vpack.c.b16 %v307, %v306
    %v367 = vpack.c.b16 %v309, %v308
    %v368 = vpack.c.b16 %v311, %v310
    %v369 = vpack.c.b16 %v313, %v312
    %v370 = vpack.c.b16 %v315, %v314
    %v371 = vpack.c.b16 %v317, %v316
    %v372 = vpack.c.b16 %v319, %v318
    %v373 = vpack.c.b16 %v321, %v320
    %v374 = vpack.c.b16 %v323, %v322
    %v375 = vpack.c.b16 %v325, %v324
    %v376 = vpack.c.b16 %v327, %v326
    %vm426 = vcmask 130048
    %v428 = vsel %vm426, %v29, 0
    %430 = vmatpush.bf16.msra.mxu0 %v335
    %431 = vmatpush.bf16.msra.mxu0 %v334
    %432 = vmatpush.bf16.msra.mxu0 %v333
    %433 = vmatpush.bf16.msra.mxu0 %v332
    %434 = vmatpush.bf16.msra.mxu0 %v331
    %435 = vmatpush.bf16.msra.mxu0 %v330
    %436 = vmatpush.bf16.msra.mxu0 %v329
    %437 = vmatpush.bf16.msra.mxu0 %v328
    %438 = vmatmul.bf16.gmra.mxu0 %v23
    %v439 = vpop.f32.mrf.mxu0
    %v440 = vadd.f32 %v130, %v439
    %v441 = vpop.f32.mrf.mxu0
    %442 = vdwg.mxu0
    %443 = vmatpush.bf16.msra.mxu0 %v343
    %444 = vmatpush.bf16.msra.mxu0 %v342
    %445 = vmatpush.bf16.msra.mxu0 %v341
    %446 = vmatpush.bf16.msra.mxu0 %v340
    %447 = vmatpush.bf16.msra.mxu0 %v339
    %448 = vmatpush.bf16.msra.mxu0 %v338
    %449 = vmatpush.bf16.msra.mxu0 %v337
    %450 = vmatpush.bf16.msra.mxu0 %v336
    %451 = vmatmul.bf16.gmra.mxu0 %v24
    %v452 = vpop.f32.mrf.mxu0
    %v453 = vadd.f32 %v440, %v452
    %v454 = vpop.f32.mrf.mxu0
    %455 = vdwg.mxu0
    %456 = vmatpush.bf16.msra.mxu0 %v351
    %457 = vmatpush.bf16.msra.mxu0 %v350
    %458 = vmatpush.bf16.msra.mxu0 %v349
    %459 = vmatpush.bf16.msra.mxu0 %v348
    %460 = vmatpush.bf16.msra.mxu0 %v347
    %461 = vmatpush.bf16.msra.mxu0 %v346
    %462 = vmatpush.bf16.msra.mxu0 %v345
    %463 = vmatpush.bf16.msra.mxu0 %v344
    %464 = vmatmul.bf16.gmra.mxu0 %v25
    %v465 = vpop.f32.mrf.mxu0
    %v466 = vadd.f32 %v453, %v465
    %v467 = vpop.f32.mrf.mxu0
    %468 = vdwg.mxu0
    %469 = vmatpush.bf16.msra.mxu0 %v359
    %470 = vmatpush.bf16.msra.mxu0 %v358
    %471 = vmatpush.bf16.msra.mxu0 %v357
    %472 = vmatpush.bf16.msra.mxu0 %v356
    %473 = vmatpush.bf16.msra.mxu0 %v355
    %474 = vmatpush.bf16.msra.mxu0 %v354
    %475 = vmatpush.bf16.msra.mxu0 %v353
    %476 = vmatpush.bf16.msra.mxu0 %v352
    %477 = vmatmul.bf16.gmra.mxu0 %v26
    %v478 = vpop.f32.mrf.mxu0
    %v479 = vadd.f32 %v466, %v478
    %v480 = vpop.f32.mrf.mxu0
    %481 = vdwg.mxu0
    %482 = vmatpush.bf16.msra.mxu0 %v367
    %483 = vmatpush.bf16.msra.mxu0 %v366
    %484 = vmatpush.bf16.msra.mxu0 %v365
    %485 = vmatpush.bf16.msra.mxu0 %v364
    %486 = vmatpush.bf16.msra.mxu0 %v363
    %487 = vmatpush.bf16.msra.mxu0 %v362
    %488 = vmatpush.bf16.msra.mxu0 %v361
    %489 = vmatpush.bf16.msra.mxu0 %v360
    %490 = vmatmul.bf16.gmra.mxu0 %v27
    %v491 = vpop.f32.mrf.mxu0
    %v492 = vadd.f32 %v479, %v491
    %v493 = vpop.f32.mrf.mxu0
    %494 = vdwg.mxu0
    %495 = vmatpush.bf16.msra.mxu0 %v375
    %496 = vmatpush.bf16.msra.mxu0 %v374
    %497 = vmatpush.bf16.msra.mxu0 %v373
    %498 = vmatpush.bf16.msra.mxu0 %v372
    %499 = vmatpush.bf16.msra.mxu0 %v371
    %500 = vmatpush.bf16.msra.mxu0 %v370
    %501 = vmatpush.bf16.msra.mxu0 %v369
    %502 = vmatpush.bf16.msra.mxu0 %v368
    %503 = vmatmul.bf16.gmra.mxu0 %v28
    %v504 = vpop.f32.mrf.mxu0
    %v505 = vadd.f32 %v492, %v504
    %v506 = vpop.f32.mrf.mxu0
    %507 = vdwg.mxu0
    %508 = vmatpush.bf16.msra.mxu0 0
    %509 = vmatpush.bf16.msra.mxu0 0
    %510 = vmatpush.bf16.msra.mxu0 0
    %511 = vmatpush.bf16.msra.mxu0 0
    %512 = vmatpush.bf16.msra.mxu0 0
    %513 = vmatpush.bf16.msra.mxu0 0
    %514 = vmatpush.bf16.msra.mxu0 0
    %515 = vmatpush.bf16.msra.mxu0 %v376
    %516 = vmatmul.bf16.gmra.mxu0 %v428
    %v517 = vpop.f32.mrf.mxu0
    %v518 = vadd.f32 %v505, %v517
    %v519 = vpop.f32.mrf.mxu0
    %520 = vdwg.mxu0
    %vm521 = vcmask 80896
    %522 = vst.msk [vmem:[#allocation2] sm:$0xff] %vm521, %v518
    // Predicated region
    $region14: #{tpu_custom_call.1} parent=1 // pred_check
      _
    $region15: #{tpu_custom_call.1} parent=1 // pred_check_branch
      %524 = sbr.rel (0) target = $region17
    $region16: #{tpu_custom_call.1} parent=1 // pred_region
      %526 = vsyncadd [#allocation3], 0
      %s528 = sshll.u32 [#allocation2], 4
      %s529 = int_to_ptr.vmem [resolvable:$true] %s528
      %s530 = sshll.u32 %s3, 4
      %s531 = int_to_ptr.hbm [resolvable:$true] %s530
      %533 = dma.vmem_to_hbm [thread:$0]  %s529, 128, %s531, [#allocation3]
    $region17: #{tpu_custom_call.1} parent=1 // pred_fallthru
      _
    // Predicated region
    $region18: #{tpu_custom_call.1} parent=1 // pred_check
      _
    $region19: #{tpu_custom_call.1} parent=1 // pred_check_branch
      %535 = sbr.rel (0) target = $region21
    $region20: #{tpu_custom_call.1} parent=1 // pred_region
      %537 = dma.done [#allocation3], 128
    $region21: #{tpu_custom_call.1} parent=1 // pred_fallthru
      _
    %538 = vsyncpa [#allocation3], 1

</llo_original>
